<compile_context>
chip_gen: v7x
topology: tpu7x:2x2x1
jax: 0.10.0
libtpu: 0.0.40
codegen_flags: <defaults>
</compile_context>

<pallas_src>
import functools

import jax
import jax.numpy as jnp
from jax.experimental import pallas as pl
from jax.experimental.pallas import tpu as pltpu

_THETA = 0.1
_LANES = 128
_MAX_TILE_ROWS = 1024            # 1024 x 128 x 4B = 512 KiB per f32 input block


def _huber(x, theta=_THETA):
    # Huber loss from the DVIS paper (theta = 0.1), elementwise on an f32 tile.
    # where-based select (cheaper than float-mask multiply-add form).
    quad = x * x * (1.0 / (2.0 * theta))
    lin = x - 0.5 * theta          # x - theta + theta/2
    return jnp.where(x < theta, quad, lin)


def _binary_loss_kernel(yp_ref, yt_ref, out_ref, *, margin, total, tile_rows):
    i = pl.program_id(0)

    yp = yp_ref[...].astype(jnp.float32)
    yt = yt_ref[...].astype(jnp.float32)

    is_fg = yt > 0.5
    loss_0 = _huber(jnp.maximum(yp, 0.0))            # huber(relu(y_pred))
    loss_1 = _huber(jnp.maximum(margin - yp, 0.0))   # huber(relu(margin - y_pred))
    loss = jnp.where(is_fg, loss_1, loss_0)

    # Mask padding / partial-tile garbage at element granularity.
    row = jax.lax.broadcasted_iota(jnp.int32, (tile_rows, _LANES), 0)
    lane = jax.lax.broadcasted_iota(jnp.int32, (tile_rows, _LANES), 1)
    gidx = (i * tile_rows + row) * _LANES + lane
    loss = jnp.where(gidx < total, loss, 0.0)

    # Per-tile partial sum reduced to one (8, 128) vreg: the reshape only splits
    # the leading (sublane-major) axis, so the reduction is pure VPU vreg adds.
    out_ref[...] = loss.reshape(tile_rows // 8, 8, _LANES).sum(axis=0)


def binary_loss(y_pred, y_true, margin=2.0):
    """Pallas equivalent of BinaryLoss(margin).forward(y_pred, y_true) -> scalar f32."""
    total = int(y_pred.size)
    yp = jnp.ravel(y_pred)          # no dtype cast: kernel casts per-tile
    yt = jnp.ravel(y_true)

    min_block = 8 * _LANES          # one minimal (8,128) f32 tile = 1024 elements
    padded = pl.cdiv(total, min_block) * min_block
    if padded != total:
        # Only copy when the element count isn't already tile-aligned.
        yp = jnp.pad(yp, (0, padded - total))
        yt = jnpp_pad = jnp.pad(yt, (0, padded - total))
    rows = padded // _LANES                         # multiple of 8
    tile_rows = min(_MAX_TILE_ROWS, rows)           # also a multiple of 8
    num_tiles = pl.cdiv(rows, tile_rows)

    yp2 = yp.reshape(rows, _LANES)
    yt2 = yt.reshape(rows, _LANES)

    kernel = functools.partial(
        _binary_loss_kernel,
        margin=float(margin),
        total=total,
        tile_rows=int(tile_rows),
    )

    partial_sums = pl.pallas_call(
        kernel,
        out_shape=jax.ShapeDtypeStruct((num_tiles * 8, _LANES), jnp.float32),
        grid_spec=pltpu.PrefetchScalarGridSpec(
            num_scalar_prefetch=0,
            grid=(num_tiles,),
            in_specs=[
                pl.BlockSpec((tile_rows, _LANES), lambda i: (i, 0)),
                pl.BlockSpec((tile_rows, _LANES), lambda i: (i, 0)),
            ],
            out_specs=pl.BlockSpec((8, _LANES), lambda i: (i, 0)),
        ),
        compiler_params=pltpu.CompilerParams(
            dimension_semantics=("parallel",)),
    )(yp2, yt2)

    # .mean() over the ORIGINAL (unpadded) element count.
    return (jnp.sum(partial_sums) / jnp.float32(total)).astype(jnp.float32)


def _binary_loss_ref(y_pred, y_true, margin=2.0, theta=_THETA):
    # Pure-JAX literal transcription of the PyTorch module (float-mask form).
    less_grad = 1.0 / (2.0 * theta)
    less_bias = less_grad * theta ** 2

    def huber(x):
        lt = (x < theta).astype(jnp.float32)
        return lt * x * x * less_grad + (1.0 - lt) * (x - theta + less_bias)

    yp = y_pred.astype(jnp.float32)
    is_fg = (y_true > 0.5).astype(jnp.float32)
    loss_0 = huber(jnp.maximum(yp, 0.0))
    loss_1 = huber(jnp.maximum(margin - yp, 0.0))
    loss = (1.0 - is_fg) * loss_0 + is_fg * loss_1
    return jnp.mean(loss).astype(jnp.float32)


if __name__ == "__main__":
    key = jax.random.PRNGKey(0)
    k1, k2, k3, k4 = jax.random.split(key, 4)

    ok = True

    # Case 1: NCHW map, element count already tile-aligned (no pad path).
    y_pred = jax.random.normal(k1, (2, 4, 16, 16), dtype=jnp.float32) * 2.0
    y_true = (jax.random.uniform(k2, (2, 4, 16, 16)) > 0.5).astype(jnp.float32)
    out = jax.block_until_ready(binary_loss(y_pred, y_true, margin=2.0))
    ref = _binary_loss_ref(y_pred, y_true, margin=2.0)
    ok &= bool(jnp.allclose(out, ref, rtol=1e-5, atol=1e-5))
    if not ok:
        raise AssertionError(f"mismatch (aligned case): kernel={out} ref={ref}")

    # Case 2: non-tile-aligned element count (exercises pad + in-kernel mask).
    y_pred2 = jax.random.normal(k3, (2, 3, 11, 13), dtype=jnp.float32) * 2.0
    y_true2 = (jax.random.uniform(k4, (2, 3, 11, 13)) > 0.5).astype(jnp.float32)
    out2 = jax.block_until_ready(binary_loss(y_pred2, y_true2, margin=2.0))
    ref2 = _binary_loss_ref(y_pred2, y_true2, margin=2.0)
    if not bool(jnp.allclose(out2, ref2, rtol=1e-5, atol=1e-5)):
        raise AssertionError(f"mismatch (masked case): kernel={out2} ref={ref2}")

    print("KERNEL_OK")
</pallas_src>

<mosaic_0001>
module attributes {stable_mosaic.version = 11 : i64} {
  func.func @_binary_loss_kernel(%arg0: i32, %arg1: memref<16x128xf32, #tpu.memory_space<vmem>>, %arg2: memref<16x128xf32, #tpu.memory_space<vmem>>, %arg3: memref<8x128xf32, #tpu.memory_space<vmem>>) attributes {dimension_semantics = [#tpu.dimension_semantics<parallel>], iteration_bounds = array<i64: 1>, scalar_prefetch = 0 : i64, scratch_operands = 0 : i64, tpu.core_type = #tpu.core_type<tc>, window_params = [{transform_indices = @transform_0, window_bounds = array<i64: 16, 128>}, {transform_indices = @transform_1, window_bounds = array<i64: 16, 128>}, {transform_indices = @transform_2, window_bounds = array<i64: 8, 128>}]} {
    %c0 = arith.constant 0 : index
    %c0_0 = arith.constant 0 : index
    %0 = vector.load %arg1[%c0, %c0_0] : memref<16x128xf32, #tpu.memory_space<vmem>>, vector<16x128xf32>
    %c0_1 = arith.constant 0 : index
    %c0_2 = arith.constant 0 : index
    %1 = vector.load %arg2[%c0_1, %c0_2] : memref<16x128xf32, #tpu.memory_space<vmem>>, vector<16x128xf32>
    %cst = arith.constant 5.000000e-01 : f32
    %2 = vector.broadcast %cst : f32 to vector<16x128xf32>
    %3 = arith.cmpf ogt, %1, %2 : vector<16x128xf32>
    %cst_3 = arith.constant 0.000000e+00 : f32
    %4 = vector.broadcast %cst_3 : f32 to vector<16x128xf32>
    %5 = arith.maximumf %0, %4 : vector<16x128xf32>
    %6 = arith.mulf %5, %5 : vector<16x128xf32>
    %cst_4 = arith.constant 5.000000e+00 : f32
    %7 = vector.broadcast %cst_4 : f32 to vector<16x128xf32>
    %8 = arith.mulf %6, %7 : vector<16x128xf32>
    %cst_5 = arith.constant 5.000000e-02 : f32
    %9 = vector.broadcast %cst_5 : f32 to vector<16x128xf32>
    %10 = arith.subf %5, %9 : vector<16x128xf32>
    %cst_6 = arith.constant 1.000000e-01 : f32
    %11 = vector.broadcast %cst_6 : f32 to vector<16x128xf32>
    %12 = arith.cmpf olt, %5, %11 : vector<16x128xf32>
    %13 = arith.select %12, %8, %10 : vector<16x128xi1>, vector<16x128xf32>
    %cst_7 = arith.constant 2.000000e+00 : f32
    %14 = vector.broadcast %cst_7 : f32 to vector<16x128xf32>
    %15 = arith.subf %14, %0 : vector<16x128xf32>
    %cst_8 = arith.constant 0.000000e+00 : f32
    %16 = vector.broadcast %cst_8 : f32 to vector<16x128xf32>
    %17 = arith.maximumf %15, %16 : vector<16x128xf32>
    %18 = arith.mulf %17, %17 : vector<16x128xf32>
    %cst_9 = arith.constant 5.000000e+00 : f32
    %19 = vector.broadcast %cst_9 : f32 to vector<16x128xf32>
    %20 = arith.mulf %18, %19 : vector<16x128xf32>
    %cst_10 = arith.constant 5.000000e-02 : f32
    %21 = vector.broadcast %cst_10 : f32 to vector<16x128xf32>
    %22 = arith.subf %17, %21 : vector<16x128xf32>
    %cst_11 = arith.constant 1.000000e-01 : f32
    %23 = vector.broadcast %cst_11 : f32 to vector<16x128xf32>
    %24 = arith.cmpf olt, %17, %23 : vector<16x128xf32>
    %25 = arith.select %24, %20, %22 : vector<16x128xi1>, vector<16x128xf32>
    %26 = arith.select %3, %25, %13 : vector<16x128xi1>, vector<16x128xf32>
    %27 = tpu.iota {dimensions = array<i32: 0>} : vector<16x128xi32>
    %28 = tpu.iota {dimensions = array<i32: 1>} : vector<16x128xi32>
    %c16_i32 = arith.constant 16 : i32
    %29 = arith.muli %arg0, %c16_i32 : i32
    %30 = vector.broadcast %29 : i32 to vector<16x128xi32>
    %31 = arith.addi %30, %27 : vector<16x128xi32>
    %c128_i32 = arith.constant 128 : i32
    %32 = vector.broadcast %c128_i32 : i32 to vector<16x128xi32>
    %33 = arith.muli %31, %32 : vector<16x128xi32>
    %34 = arith.addi %33, %28 : vector<16x128xi32>
    %c2048_i32 = arith.constant 2048 : i32
    %35 = vector.broadcast %c2048_i32 : i32 to vector<16x128xi32>
    %36 = arith.cmpi slt, %34, %35 : vector<16x128xi32>
    %cst_12 = arith.constant 0.000000e+00 : f32
    %37 = vector.broadcast %cst_12 : f32 to vector<16x128xf32>
    %38 = arith.select %36, %26, %37 : vector<16x128xi1>, vector<16x128xf32>
    %39 = vector.shape_cast %38 : vector<16x128xf32> to vector<2x8x128xf32>
    %cst_13 = arith.constant dense<0.000000e+00> : vector<8x128xf32>
    %40 = vector.multi_reduction <add>, %39, %cst_13 [0] : vector<2x8x128xf32> to vector<8x128xf32>
    %c0_14 = arith.constant 0 : index
    %c0_15 = arith.constant 0 : index
    %41 = vector.load %arg3[%c0_14, %c0_15] : memref<8x128xf32, #tpu.memory_space<vmem>>, vector<8x128xf32>
    tpu.vector_store %arg3[%c0_14, %c0_15], %40 {strides = array<i32>} : memref<8x128xf32, #tpu.memory_space<vmem>>, vector<8x128xf32>,
    return
  }
  func.func @transform_0(%arg0: i32) -> (i32, i32) {
    %c0_i32 = arith.constant 0 : i32
    %c0_i32_0 = arith.constant 0 : i32
    return %arg0, %c0_i32 : i32, i32
  }
  func.func @transform_1(%arg0: i32) -> (i32, i32) {
    %c0_i32 = arith.constant 0 : i32
    %c0_i32_0 = arith.constant 0 : i32
    return %arg0, %c0_i32 : i32, i32
  }
  func.func @transform_2(%arg0: i32) -> (i32, i32) {
    %c0_i32 = arith.constant 0 : i32
    %c0_i32_0 = arith.constant 0 : i32
    return %arg0, %c0_i32 : i32, i32
  }
}

</mosaic_0001>

<llo_original>
// kernel: tpu_custom_call.1
$region0: #{tpu_custom_call.1}
  #allocation0 [shape = 'u32[]', space=smem, size = 0x4, offset = 0x4, fixed_abs, tag = 'smem constant byte address 0x4 - core index']
  #allocation1 [shape = 'u32[144,128]{1,0:T(1,128)}', space=vmem, size = 0x12000, scoped, tag = 'internal scratch']
  %s0 = inlined_call_operand.hbm [shape: f32[16,128], index: 0, kind: input, shape index: {}]
  %s1 = inlined_call_operand.hbm [shape: f32[16,128], index: 1, kind: input, shape index: {}]
  %s2 = inlined_call_operand.hbm [shape: f32[8,128], index: 2, kind: output, shape index: {}]
  %s3 = sld [smem:[#allocation0]]
  $region26: #{tpu_custom_call.1} parent=0
    _
  %s5 = ssub.s32 1, %s3
  %s6 = scalar_select 0, %s5, %s3
  $region1: #{tpu_custom_call.1} parent=0
    #allocation2 [shape = 'u8[8192]{0}', space=vmem, size = 0x2000, scoped, tag = 'input window, operand 0, single buffered']
    #allocation3 [shape = 's32[1]{0}', space=sflag, size = 0x4, scoped, tag = 'scoped memory for tpu_custom_call.1']
    #allocation4 [shape = 's32[1]{0}', space=sflag, size = 0x4, scoped, tag = 'scoped memory for tpu_custom_call.1']
    #allocation5 [shape = 'u8[8192]{0}', space=vmem, size = 0x2000, scoped, tag = 'input window, operand 1, single buffered']
    #allocation6 [shape = 's32[1]{0}', space=sflag, size = 0x4, scoped, tag = 'scoped memory for tpu_custom_call.1']
    #allocation7 [shape = 'u8[4096]{0}', space=vmem, size = 0x1000, scoped, tag = 'output window, operand 0, single buffered']
    %7 = vsyncpa [#allocation3], 0
    %8 = vsyncpa [#allocation6], 0
    %9 = vsyncpa [#allocation4], 0
    // Predicated region
    $region2: #{tpu_custom_call.1} parent=1 // pred_check
      _
    $region3: #{tpu_custom_call.1} parent=1 // pred_check_branch
      %11 = sbr.rel (0) target = $region5
    $region4: #{tpu_custom_call.1} parent=1 // pred_region
      %s13 = ssub.s32 256, 256
      %14 = vsyncadd [#allocation3], %s13
      %s15 = sshll.u32 [#allocation2], 4
      %s16 = int_to_ptr.vmem [resolvable:$true] %s15
      %21 = dma.hbm_to_vmem [thread:$0]  %s0, 256, %s16, [#allocation3], 128, 128, 8
    $region5: #{tpu_custom_call.1} parent=1 // pred_fallthru
      _
    // Predicated region
    $region6: #{tpu_custom_call.1} parent=1 // pred_check
      _
    $region7: #{tpu_custom_call.1} parent=1 // pred_check_branch
      %23 = sbr.rel (0) target = $region9
    $region8: #{tpu_custom_call.1} parent=1 // pred_region
      %s25 = ssub.s32 256, 256
      %26 = vsyncadd [#allocation6], %s25
      %s27 = sshll.u32 [#allocation5], 4
      %s28 = int_to_ptr.vmem [resolvable:$true] %s27
      %33 = dma.hbm_to_vmem [thread:$0]  %s1, 256, %s28, [#allocation6], 128, 128, 8
    $region9: #{tpu_custom_call.1} parent=1 // pred_fallthru
      _
    // Predicated region
    $region10: #{tpu_custom_call.1} parent=1 // pred_check
      _
    $region11: #{tpu_custom_call.1} parent=1 // pred_check_branch
      %35 = sbr.rel (0) target = $region13
    $region12: #{tpu_custom_call.1} parent=1 // pred_region
      %36 = dma.done [#allocation3], 256
    $region13: #{tpu_custom_call.1} parent=1 // pred_fallthru
      _
    // Predicated region
    $region14: #{tpu_custom_call.1} parent=1 // pred_check
      _
    $region15: #{tpu_custom_call.1} parent=1 // pred_check_branch
      %38 = sbr.rel (0) target = $region17
    $region16: #{tpu_custom_call.1} parent=1 // pred_region
      %39 = dma.done [#allocation6], 256
    $region17: #{tpu_custom_call.1} parent=1 // pred_fallthru
      _
    %v40 = vld [vmem:[#allocation2] sm:$0xff]
    %v41 = vld [vmem:[#allocation2 + $0x8] sm:$0xff]
    %v42 = vld [vmem:[#allocation5] sm:$0xff]
    %v43 = vld [vmem:[#allocation5 + $0x8] sm:$0xff]
    %vm44 = vcmp.gt.f32.partialorder %v42, 0.5
    %vm45 = vcmp.gt.f32.partialorder %v43, 0.5
    %v46 = vmax.f32 %v40, 0.0
    %v47 = vmax.f32 %v41, 0.0
    %v48 = vmul.f32 %v46, %v46
    %v49 = vmul.f32 %v47, %v47
    %v50 = vmul.f32 %v48, 5.0
    %v51 = vmul.f32 %v49, 5.0
    %v52 = vsub.f32 %v46, 0.05
    %v53 = vsub.f32 %v47, 0.05
    %vm54 = vcmp.lt.f32.partialorder %v46, 0.1
    %vm55 = vcmp.lt.f32.partialorder %v47, 0.1
    %v56 = vsel %vm54, %v50, %v52
    %v57 = vsel %vm55, %v51, %v53
    %v58 = vsub.f32 2.0, %v40
    %v59 = vsub.f32 2.0, %v41
    %v60 = vmax.f32 %v58, 0.0
    %v61 = vmax.f32 %v59, 0.0
    %v62 = vmul.f32 %v60, %v60
    %v63 = vmul.f32 %v61, %v61
    %v64 = vmul.f32 %v62, 5.0
    %v65 = vmul.f32 %v63, 5.0
    %v66 = vsub.f32 %v60, 0.05
    %v67 = vsub.f32 %v61, 0.05
    %vm68 = vcmp.lt.f32.partialorder %v60, 0.1
    %vm69 = vcmp.lt.f32.partialorder %v61, 0.1
    %v70 = vsel %vm68, %v64, %v66
    %v71 = vsel %vm69, %v65, %v67
    %v72 = vsel %vm44, %v70, %v56
    %v73 = vsel %vm45, %v71, %v57
    %v74 = vlaneseq
    %v75 = vshrl.u32 %v74, 7
    %v76 = vadd.s32 %v75, 8
    %v77 = vlaneseq
    %v78 = vand.u32 %v77, 127
    %s79 = smul.u32 0, 16
    %v80 = vstv %s79
    %v81 = vadd.s32 %v80, %v75
    %v82 = vadd.s32 %v80, %v76
    %v83 = vmul.u32 %v81, 128
    %v84 = vmul.u32 %v82, 128
    %v85 = vadd.s32 %v83, %v78
    %v86 = vadd.s32 %v84, %v78
    %vm87 = vcmp.lt.s32.totalorder %v85, 2048
    %vm88 = vcmp.lt.s32.totalorder %v86, 2048
    %v89 = vsel %vm87, %v72, 0.0
    %v90 = vsel %vm88, %v73, 0.0
    %v91 = vadd.f32 %v89, %v90
    %92 = vst [vmem:[#allocation7] sm:$0xff] %v91
    // Predicated region
    $region18: #{tpu_custom_call.1} parent=1 // pred_check
      _
    $region19: #{tpu_custom_call.1} parent=1 // pred_check_branch
      %94 = sbr.rel (0) target = $region21
    $region20: #{tpu_custom_call.1} parent=1 // pred_region
      %s96 = ssub.s32 128, 128
      %97 = vsyncadd [#allocation4], %s96
      %s99 = sshll.u32 [#allocation7], 4
      %s100 = int_to_ptr.vmem [resolvable:$true] %s99
      %102 = dma.vmem_to_hbm [thread:$0]  %s100, 128, %s2, [#allocation4]
    $region21: #{tpu_custom_call.1} parent=1 // pred_fallthru
      _
    // Predicated region
    $region22: #{tpu_custom_call.1} parent=1 // pred_check
      _
    $region23: #{tpu_custom_call.1} parent=1 // pred_check_branch
      %104 = sbr.rel (0) target = $region25
    $region24: #{tpu_custom_call.1} parent=1 // pred_region
      %105 = dma.done [#allocation4], 128
    $region25: #{tpu_custom_call.1} parent=1 // pred_fallthru
      _
    %106 = vsyncpa [#allocation3], 1
    %107 = vsyncpa [#allocation6], 1
    %108 = vsyncpa [#allocation4], 1

</llo_original>
